<compile_context>
chip_gen: v7x
topology: tpu7x:2x2x1
jax: 0.10.0
libtpu: 0.0.40
codegen_flags: <defaults>
</compile_context>

<pallas_src>
import functools
from types import SimpleNamespace

import jax
import jax.numpy as jnp
from jax import lax
from jax.experimental import pallas as pl
from jax.experimental.pallas import tpu as pltpu

LEAKY_SLOPE = 0.01   # nn.LeakyReLU default negative_slope
_SKINNY = 8          # contraction dims <= this skip the MXU (VPU outer product)
_SUB_N = 512         # max lanes per in-kernel compute sub-tile (vreg pressure cap)


def _round_up(x, m):
    return ((x + m - 1) // m) * m


def _apply_act(h, act):
    if act == "leakyrelu":
        # identical to leaky_relu for 0 < slope < 1; drops the compare+select
        return jnp.maximum(h, LEAKY_SLOPE * h)
    if act == "relu":
        return jnp.maximum(h, 0.0)
    if act == "none":
        return h
    raise NotImplementedError(f"act_type={act}")
    # TODO(synk): trainable/parametric activation types (a, b, trainable=True) are
    # not needed for the default MappingMLP config (leakyrelu / none).


def _linear(w, b, h):
    """y = W @ h + b with W:(out,in), h:(in, n), b:(out,1)."""
    out_i, in_i = w.shape
    if in_i <= _SKINNY:
        # Skinny *contraction* (first layer, K=2): an MXU pass would waste the
        # systolic array, so use broadcast multiply-adds on the VPU.
        # (Skinny-*output* layers still go to the MXU below — it is idle anyway.)
        acc = w[:, 0:1] * h[0:1, :]
        for k in range(1, in_i):
            acc = acc + w[:, k:k + 1] * h[k:k + 1, :]
        return acc + b
    # MXU path.  w may have been pre-cast (e.g. bf16) in the glue; accumulate f32.
    return jnp.dot(w, h.astype(w.dtype), preferred_element_type=jnp.float32) + b


def _make_mlp_kernel(num_layers, act, last_act, sub_n, n_sub):
    def kernel(*refs):
        x_ref, o_ref = refs[0], refs[-1]
        param_refs = refs[1:-1]                              # (w0, b0, w1, b1, ...)

        # Hoist params out of the sub-chunk loop (tiny; VMEM-resident across grid).
        params = []
        for i in range(num_layers):
            w = param_refs[2 * i][...]
            if w.shape[1] <= _SKINNY:
                w = w.astype(jnp.float32)                    # VPU path stays f32
            b = param_refs[2 * i + 1][...].astype(jnp.float32)
            params.append((w, b))

        def body(j, carry):
            start = j * sub_n
            if not isinstance(start, int):
                start = pl.multiple_of(start, 128)           # aligned vector loads
            h = x_ref[:, pl.ds(start, sub_n)].astype(jnp.float32)
            for i, (w, b) in enumerate(params):
                h = _linear(w, b, h)
                h = _apply_act(h, act if i < num_layers - 1 else last_act)
            o_ref[:, pl.ds(start, sub_n)] = h.astype(o_ref.dtype)
            return carry

        if n_sub == 1:
            body(0, 0)
        else:
            lax.fori_loop(0, n_sub, body, 0, unroll=n_sub <= 4)

    return kernel


def mapping_mlp_forward(x, weights, biases, *, act="leakyrelu", last_act="none",
                        block_n=1024, dot_dtype=jnp.float32):
    """x: [N, inp_dim].  weights[i]: (out_i, in_i) (PyTorch layout).  biases[i]: (out_i, 1)."""
    N, inp_dim = x.shape
    num_layers = len(weights)
    out_dim = weights[-1].shape[0]

    # ---- block / sub-tile selection --------------------------------------
    n_lane = _round_up(N, 128)
    block_n = _round_up(max(128, min(block_n, n_lane)), 128)
    if n_lane >= 256:
        # v7x: guarantee >= 2 "parallel" grid steps so both TensorCores get work
        # (harmless ~0.35us extra step on single-core v5e/v6e).
        block_n = min(block_n, _round_up(pl.cdiv(n_lane, 2), 128))
    # Balance blocks so the ragged last block is not mostly padding.
    n_blocks = pl.cdiv(n_lane, block_n)
    block_n = _round_up(pl.cdiv(n_lane, n_blocks), 128)
    # Compute sub-tile: largest multiple of 128 dividing block_n, capped at _SUB_N,
    # so (32, sub_n) f32 intermediates stay well inside the 64-vreg file.
    sub_n = 128
    for cand in (_SUB_N, 384, 256, 128):
        if cand <= block_n and block_n % cand == 0:
            sub_n = cand
            break
    n_sub = block_n // sub_n
    grid = (pl.cdiv(N, block_n),)   # ragged last block: Pallas masks edge stores

    # Feature-major: features on sublanes, points on lanes -> lane-dense DMA/store.
    xT = jnp.transpose(x).astype(jnp.float32)                 # (inp_dim, N)
    # (No jnp.pad / trailing slice: padded lanes are garbage in-kernel but are
    #  masked on the HBM writeback; the MLP is pointwise over N.)

    kernel = _make_mlp_kernel(num_layers, act, last_act, sub_n, n_sub)

    in_specs = [pl.BlockSpec((inp_dim, block_n), lambda i: (0, i))]
    args = [xT]
    for w, b in zip(weights, biases):
        # MXU layers: pre-cast weight to dot_dtype once in the glue.
        w_arg = w if w.shape[1] <= _SKINNY else w.astype(dot_dtype)
        b_arg = jnp.asarray(b, jnp.float32).reshape(-1, 1)
        # Full (untiled) weight / bias blocks with constant index maps: they stay
        # VMEM-resident and are not re-DMA'd per grid step.  (pl.Buffered(1) would
        # trim the second buffer, but the params are only a few KiB.)
        in_specs.append(pl.BlockSpec(w_arg.shape, lambda i: (0, 0)))
        in_specs.append(pl.BlockSpec(b_arg.shape, lambda i: (0, 0)))
        args.append(w_arg)
        args.append(b_arg)
    out_spec = pl.BlockSpec((out_dim, block_n), lambda i: (0, i))

    outT = pl.pallas_call(
        kernel,
        out_shape=jax.ShapeDtypeStruct((out_dim, N), jnp.float32),
        grid=grid,
        in_specs=in_specs,
        out_specs=out_spec,
        compiler_params=pltpu.CompilerParams(
            dimension_semantics=("parallel",)),
    )(*args)

    return jnp.transpose(outT).astype(x.dtype)


def init_params(key, inp_dim, out_dim, num_layers, num_channels, use_wn=True):
    """Deterministic init mimicking nn.Linear defaults + weight_norm (PyTorch layout)."""
    weights, biases = [], []
    for i in range(num_layers):
        cur_inp = inp_dim if i == 0 else num_channels
        cur_out = out_dim if i == num_layers - 1 else num_channels
        key, kw, kb = jax.random.split(key, 3)
        bound = 1.0 / jnp.sqrt(cur_inp)
        v = jax.random.uniform(kw, (cur_out, cur_inp), jnp.float32, -bound, bound)
        b = jax.random.uniform(kb, (cur_out,), jnp.float32, -bound, bound)
        if use_wn:
            # weight_norm(dim=0): g init = ||v|| per output row -> W_eff == v at init
            norm = jnp.sqrt(jnp.sum(v * v, axis=1, keepdims=True))
            w_eff = norm * v / jnp.maximum(norm, 1e-12)
        else:
            w_eff = v
        weights.append(w_eff)             # (out, in): kernel computes W @ h
        biases.append(b.reshape(-1, 1))   # (out, 1): lane-broadcast in feature-major
    return weights, biases


def reference_forward(x, weights, biases, act="leakyrelu", last_act="none"):
    h = x.astype(jnp.float32)
    n = len(weights)
    for i, (w, b) in enumerate(zip(weights, biases)):
        h = h @ w.T + b.reshape(1, -1)
        h = _apply_act(h, act if i < n - 1 else last_act)
    return h.astype(x.dtype)


if __name__ == "__main__":
    # args used by MappingMLP
    args = SimpleNamespace(num_layers=3, dim=32, act="leakyrelu",
                           last_act="none", use_wn=True)
    inp_dim, out_dim = 2, 2
    N = 1000  # deliberately not a multiple of 128 (exercises ragged masked stores)

    key = jax.random.PRNGKey(0)
    key, kx = jax.random.split(key)
    x = jax.random.normal(kx, (N, inp_dim), jnp.float32)

    weights, biases = init_params(key, inp_dim, out_dim,
                                  args.num_layers, args.dim, args.use_wn)

    ref = reference_forward(x, weights, biases, args.act, args.last_act)

    # f32 MXU inputs (matches MappingMLP default use_amp=False)
    fwd = jax.jit(functools.partial(mapping_mlp_forward,
                                    act=args.act, last_act=args.last_act))
    out = fwd(x, weights, biases)
    jax.block_until_ready(out)
    assert out.shape == (N, out_dim)
    assert jnp.allclose(out, ref, atol=1e-4, rtol=1e-4)

    # bf16 MXU inputs (perf-review option, ~use_amp=True); f32 accumulation.
    fwd_bf16 = jax.jit(functools.partial(mapping_mlp_forward,
                                         act=args.act, last_act=args.last_act,
                                         dot_dtype=jnp.bfloat16))
    out_bf16 = fwd_bf16(x, weights, biases)
    jax.block_until_ready(out_bf16)
    assert jnp.allclose(out_bf16, ref, atol=5e-2, rtol=5e-2)

    print("KERNEL_OK")
</pallas_src>

<mosaic_0001>
module attributes {stable_mosaic.version = 11 : i64} {
  func.func @kernel(%arg0: i32, %arg1: memref<2x512xf32, #tpu.memory_space<vmem>>, %arg2: memref<32x2xf32, #tpu.memory_space<vmem>>, %arg3: memref<32x1xf32, #tpu.memory_space<vmem>>, %arg4: memref<32x32xf32, #tpu.memory_space<vmem>>, %arg5: memref<32x1xf32, #tpu.memory_space<vmem>>, %arg6: memref<2x32xf32, #tpu.memory_space<vmem>>, %arg7: memref<2x1xf32, #tpu.memory_space<vmem>>, %arg8: memref<2x512xf32, #tpu.memory_space<vmem>>) attributes {dimension_semantics = [#tpu.dimension_semantics<parallel>], iteration_bounds = array<i64: 2>, scalar_prefetch = 0 : i64, scratch_operands = 0 : i64, tpu.core_type = #tpu.core_type<tc>, window_params = [{transform_indices = @transform_0, window_bounds = array<i64: 2, 512>}, {pipeline_mode = #tpu.pipeline_mode<synchronous>, transform_indices = @transform_1, window_bounds = array<i64: 32, 2>}, {pipeline_mode = #tpu.pipeline_mode<synchronous>, transform_indices = @transform_2, window_bounds = array<i64: 32, 1>}, {pipeline_mode = #tpu.pipeline_mode<synchronous>, transform_indices = @transform_3, window_bounds = array<i64: 32, 32>}, {pipeline_mode = #tpu.pipeline_mode<synchronous>, transform_indices = @transform_4, window_bounds = array<i64: 32, 1>}, {pipeline_mode = #tpu.pipeline_mode<synchronous>, transform_indices = @transform_5, window_bounds = array<i64: 2, 32>}, {pipeline_mode = #tpu.pipeline_mode<synchronous>, transform_indices = @transform_6, window_bounds = array<i64: 2, 1>}, {transform_indices = @transform_7, window_bounds = array<i64: 2, 512>}]} {
    %c0 = arith.constant 0 : index
    %c0_0 = arith.constant 0 : index
    %0 = vector.load %arg2[%c0, %c0_0] : memref<32x2xf32, #tpu.memory_space<vmem>>, vector<32x2xf32>
    %c0_1 = arith.constant 0 : index
    %c0_2 = arith.constant 0 : index
    %1 = vector.load %arg3[%c0_1, %c0_2] : memref<32x1xf32, #tpu.memory_space<vmem>>, vector<32x1xf32>
    %c0_3 = arith.constant 0 : index
    %c0_4 = arith.constant 0 : index
    %2 = vector.load %arg4[%c0_3, %c0_4] : memref<32x32xf32, #tpu.memory_space<vmem>>, vector<32x32xf32>
    %c0_5 = arith.constant 0 : index
    %c0_6 = arith.constant 0 : index
    %3 = vector.load %arg5[%c0_5, %c0_6] : memref<32x1xf32, #tpu.memory_space<vmem>>, vector<32x1xf32>
    %c0_7 = arith.constant 0 : index
    %c0_8 = arith.constant 0 : index
    %4 = vector.load %arg6[%c0_7, %c0_8] : memref<2x32xf32, #tpu.memory_space<vmem>>, vector<2x32xf32>
    %c0_9 = arith.constant 0 : index
    %c0_10 = arith.constant 0 : index
    %5 = vector.load %arg7[%c0_9, %c0_10] : memref<2x1xf32, #tpu.memory_space<vmem>>, vector<2x1xf32>
    %c0_11 = arith.constant 0 : index
    %c0_12 = arith.constant 0 : index
    %6 = vector.load %arg1[%c0_11, %c0_12] : memref<2x512xf32, #tpu.memory_space<vmem>>, vector<2x512xf32>
    %7 = vector.extract_strided_slice %0 {offsets = [0, 0], sizes = [32, 1], strides = [1, 1]} : vector<32x2xf32> to vector<32x1xf32>
    %8 = vector.extract_strided_slice %6 {offsets = [0, 0], sizes = [1, 512], strides = [1, 1]} : vector<2x512xf32> to vector<1x512xf32>
    %9 = vector.broadcast %7 : vector<32x1xf32> to vector<32x512xf32>
    %10 = vector.broadcast %8 : vector<1x512xf32> to vector<32x512xf32>
    %11 = arith.mulf %9, %10 : vector<32x512xf32>
    %12 = vector.extract_strided_slice %0 {offsets = [0, 1], sizes = [32, 1], strides = [1, 1]} : vector<32x2xf32> to vector<32x1xf32>
    %13 = vector.extract_strided_slice %6 {offsets = [1, 0], sizes = [1, 512], strides = [1, 1]} : vector<2x512xf32> to vector<1x512xf32>
    %14 = vector.broadcast %12 : vector<32x1xf32> to vector<32x512xf32>
    %15 = vector.broadcast %13 : vector<1x512xf32> to vector<32x512xf32>
    %16 = arith.mulf %14, %15 : vector<32x512xf32>
    %17 = arith.addf %11, %16 : vector<32x512xf32>
    %18 = vector.broadcast %1 : vector<32x1xf32> to vector<32x512xf32>
    %19 = arith.addf %17, %18 : vector<32x512xf32>
    %cst = arith.constant 0.00999999977 : f32
    %20 = vector.broadcast %cst : f32 to vector<32x512xf32>
    %21 = arith.mulf %20, %19 : vector<32x512xf32>
    %22 = arith.maximumf %19, %21 : vector<32x512xf32>
    %cst_13 = arith.constant dense<0.000000e+00> : vector<32x512xf32>
    %23 = tpu.matmul %2, %22, %cst_13 {dimension_numbers = #tpu.dot_dimension_numbers<[1], [0], [0], [1], [0, 0, 1, 1], [], []>} : vector<32x32xf32>, vector<32x512xf32>, vector<32x512xf32> -> vector<32x512xf32>
    %24 = vector.broadcast %3 : vector<32x1xf32> to vector<32x512xf32>
    %25 = arith.addf %23, %24 : vector<32x512xf32>
    %cst_14 = arith.constant 0.00999999977 : f32
    %26 = vector.broadcast %cst_14 : f32 to vector<32x512xf32>
    %27 = arith.mulf %26, %25 : vector<32x512xf32>
    %28 = arith.maximumf %25, %27 : vector<32x512xf32>
    %cst_15 = arith.constant dense<0.000000e+00> : vector<2x512xf32>
    %29 = tpu.matmul %4, %28, %cst_15 {dimension_numbers = #tpu.dot_dimension_numbers<[1], [0], [0], [1], [0, 0, 1, 1], [], []>} : vector<2x32xf32>, vector<32x512xf32>, vector<2x512xf32> -> vector<2x512xf32>
    %30 = vector.broadcast %5 : vector<2x1xf32> to vector<2x512xf32>
    %31 = arith.addf %29, %30 : vector<2x512xf32>
    %c0_16 = arith.constant 0 : index
    %c0_17 = arith.constant 0 : index
    %32 = vector.load %arg8[%c0_16, %c0_17] : memref<2x512xf32, #tpu.memory_space<vmem>>, vector<2x512xf32>
    tpu.vector_store %arg8[%c0_16, %c0_17], %31 {strides = array<i32>} : memref<2x512xf32, #tpu.memory_space<vmem>>, vector<2x512xf32>,
    return
  }
  func.func @transform_0(%arg0: i32) -> (i32, i32) {
    %c0_i32 = arith.constant 0 : i32
    %c0_i32_0 = arith.constant 0 : i32
    return %c0_i32, %arg0 : i32, i32
  }
  func.func @transform_1(%arg0: i32) -> (i32, i32) {
    %c0_i32 = arith.constant 0 : i32
    %c0_i32_0 = arith.constant 0 : i32
    %c0_i32_1 = arith.constant 0 : i32
    return %c0_i32, %c0_i32_0 : i32, i32
  }
  func.func @transform_2(%arg0: i32) -> (i32, i32) {
    %c0_i32 = arith.constant 0 : i32
    %c0_i32_0 = arith.constant 0 : i32
    %c0_i32_1 = arith.constant 0 : i32
    return %c0_i32, %c0_i32_0 : i32, i32
  }
  func.func @transform_3(%arg0: i32) -> (i32, i32) {
    %c0_i32 = arith.constant 0 : i32
    %c0_i32_0 = arith.constant 0 : i32
    %c0_i32_1 = arith.constant 0 : i32
    return %c0_i32, %c0_i32_0 : i32, i32
  }
  func.func @transform_4(%arg0: i32) -> (i32, i32) {
    %c0_i32 = arith.constant 0 : i32
    %c0_i32_0 = arith.constant 0 : i32
    %c0_i32_1 = arith.constant 0 : i32
    return %c0_i32, %c0_i32_0 : i32, i32
  }
  func.func @transform_5(%arg0: i32) -> (i32, i32) {
    %c0_i32 = arith.constant 0 : i32
    %c0_i32_0 = arith.constant 0 : i32
    %c0_i32_1 = arith.constant 0 : i32
    return %c0_i32, %c0_i32_0 : i32, i32
  }
  func.func @transform_6(%arg0: i32) -> (i32, i32) {
    %c0_i32 = arith.constant 0 : i32
    %c0_i32_0 = arith.constant 0 : i32
    %c0_i32_1 = arith.constant 0 : i32
    return %c0_i32, %c0_i32_0 : i32, i32
  }
  func.func @transform_7(%arg0: i32) -> (i32, i32) {
    %c0_i32 = arith.constant 0 : i32
    %c0_i32_0 = arith.constant 0 : i32
    return %c0_i32, %arg0 : i32, i32
  }
}

</mosaic_0001>

<llo_original>
// kernel: mapping_mlp_forward.1
$region0: #{mapping_mlp_forward.1}
  #allocation0 [shape = 'u32[]', space=smem, size = 0x4, offset = 0x4, fixed_abs, tag = 'smem constant byte address 0x4 - core index']
  #allocation1 [shape = 'u32[144,128]{1,0:T(1,128)}', space=vmem, size = 0x12000, scoped, tag = 'internal scratch']
  %s0 = inlined_call_operand.vmem [shape: f32[2,1000], index: 0, kind: input, shape index: {}]
  %s1 = inlined_call_operand.vmem [shape: f32[32,2], index: 1, kind: input, shape index: {}]
  %s2 = inlined_call_operand.vmem [shape: f32[32,1], index: 2, kind: input, shape index: {}]
  %s3 = inlined_call_operand.vmem [shape: f32[32,32], index: 3, kind: input, shape index: {}]
  %s4 = inlined_call_operand.vmem [shape: f32[32,1], index: 4, kind: input, shape index: {}]
  %s5 = inlined_call_operand.vmem [shape: f32[2,32], index: 5, kind: input, shape index: {}]
  %s6 = inlined_call_operand.vmem [shape: f32[2,1], index: 6, kind: input, shape index: {}]
  %s7 = inlined_call_operand.hbm [shape: f32[2,1000], index: 7, kind: output, shape index: {}]
  %s8 = sld [smem:[#allocation0]]
  $region61: #{mapping_mlp_forward.1} parent=0
    _
  %s10 = ssub.s32 1, %s8
  %s11 = scalar_select 0, %s10, %s8
  $region1: #{mapping_mlp_forward.1} parent=0
    #allocation2 [shape = 'u8[8192]{0}', space=vmem, size = 0x2000, scoped, tag = 'output window, operand 0']
    #allocation3 [shape = 's32[2]{0}', space=sflag, size = 0x8, scoped, tag = 'scoped memory for mapping_mlp_forward.1']
    %12 = vsyncpa [#allocation3], 0
    %s13 = scalar_lea.sflag [#allocation3], 1
    %14 = vsyncpa %s13, 0
    loop: start=0, step=1, limit=4
    $region2: #{mapping_mlp_forward.1} parent=1 // loop_pre_header
      _
    $region3: #{mapping_mlp_forward.1} parent=1 // loop_header
      %s16 = sphi 0, %s20
      %p17 = scmp.ge.s32.totalorder %s16, 4
      %s26 = sphi 0, %s28
      %s29 = sphi 0, %s26
      %s30 = sphi 0, %s29
      %s46 = sphi 0, %s30
      %s50 = sphi 0, %s50
      %s52 = sphi 0, %s50
      %s53 = sphi 0, %s52
      %s67 = sphi 0, %s53
      %s71 = sphi 0, %s71
      %s73 = sphi 0, %s71
      %s74 = sphi 0, %s73
      %s88 = sphi 0, %s74
      %s92 = sphi 0, %s92
      %s94 = sphi 0, %s92
      %s95 = sphi 0, %s94
      %s109 = sphi 0, %s95
      %s113 = sphi 0, %s113
      %s115 = sphi 0, %s113
      %s116 = sphi 0, %s115
      %s130 = sphi 0, %s116
      %s134 = sphi 0, %s134
      %s136 = sphi 0, %s134
      %s137 = sphi 0, %s136
      %s151 = sphi 0, %s137
      %s155 = sphi 0, %s155
      %s157 = sphi 0, %s155
      %s158 = sphi 0, %s157
      %s172 = sphi 0, %s158
      %s178 = sphi 0, %s180
      %s181 = sphi 0, %s178
      %s182 = sphi 0, %s181
      %s198 = sphi 0, %s182
    $region4: #{mapping_mlp_forward.1} parent=1 // loop_header_branch
      %19 = sbr.rel (%p17) target = $region8
    $region5: #{mapping_mlp_forward.1} parent=1 // loop_body
      %s21 = ssub.s32 %s16, 1
      %s22 = ssub.s32 %s16, 2
      %s23 = sadd.s32 %s16, 1
      %s24 = ssub.s32 %s16, %s23
      %p25 = scmp.eq.s32.totalorder %s24, 0
      %s27 = sadd.s32 %s26, 1
      %s28 = scalar_select %p25, %s26, %s27
      %p31 = pneg %p25
      %p32 = scmp.eq.s32.totalorder %s16, 1
      %p33 = por %p31, %p32
      %p34 = scmp.ne.s32.totalorder %s26, %s29
      %p35 = scmp.eq.s32.totalorder %s16, 0
      %p36 = por %p34, %p35
      %p37 = scmp.ne.s32.totalorder %s26, %s29
      %p38 = scmp.eq.s32.totalorder %s21, 1
      %p39 = por %p37, %p38
      %p40 = scmp.ne.s32.totalorder %s29, %s30
      %p41 = scmp.eq.s32.totalorder %s21, 0
      %p42 = por %p40, %p41
      %p43 = scmp.ne.s32.totalorder %s29, %s30
      %p44 = scmp.eq.s32.totalorder %s22, 1
      %p45 = por %p43, %p44
      %p47 = scmp.ne.s32.totalorder %s30, %s46
      %p48 = scmp.eq.s32.totalorder %s22, 0
      %p49 = por %p47, %p48
      %s51 = sadd.s32 %s50, 1
      %p54 = scmp.eq.s32.totalorder %s16, 1
      %p55 = scmp.ne.s32.totalorder %s50, %s52
      %p56 = scmp.eq.s32.totalorder %s16, 0
      %p57 = por %p55, %p56
      %p58 = scmp.ne.s32.totalorder %s50, %s52
      %p59 = scmp.eq.s32.totalorder %s21, 1
      %p60 = por %p58, %p59
      %p61 = scmp.ne.s32.totalorder %s52, %s53
      %p62 = scmp.eq.s32.totalorder %s21, 0
      %p63 = por %p61, %p62
      %p64 = scmp.ne.s32.totalorder %s52, %s53
      %p65 = scmp.eq.s32.totalorder %s22, 1
      %p66 = por %p64, %p65
      %p68 = scmp.ne.s32.totalorder %s53, %s67
      %p69 = scmp.eq.s32.totalorder %s22, 0
      %p70 = por %p68, %p69
      %s72 = sadd.s32 %s71, 1
      %p75 = scmp.eq.s32.totalorder %s16, 1
      %p76 = scmp.ne.s32.totalorder %s71, %s73
      %p77 = scmp.eq.s32.totalorder %s16, 0
      %p78 = por %p76, %p77
      %p79 = scmp.ne.s32.totalorder %s71, %s73
      %p80 = scmp.eq.s32.totalorder %s21, 1
      %p81 = por %p79, %p80
      %p82 = scmp.ne.s32.totalorder %s73, %s74
      %p83 = scmp.eq.s32.totalorder %s21, 0
      %p84 = por %p82, %p83
      %p85 = scmp.ne.s32.totalorder %s73, %s74
      %p86 = scmp.eq.s32.totalorder %s22, 1
      %p87 = por %p85, %p86
      %p89 = scmp.ne.s32.totalorder %s74, %s88
      %p90 = scmp.eq.s32.totalorder %s22, 0
      %p91 = por %p89, %p90
      %s93 = sadd.s32 %s92, 1
      %p96 = scmp.eq.s32.totalorder %s16, 1
      %p97 = scmp.ne.s32.totalorder %s92, %s94
      %p98 = scmp.eq.s32.totalorder %s16, 0
      %p99 = por %p97, %p98
      %p100 = scmp.ne.s32.totalorder %s92, %s94
      %p101 = scmp.eq.s32.totalorder %s21, 1
      %p102 = por %p100, %p101
      %p103 = scmp.ne.s32.totalorder %s94, %s95
      %p104 = scmp.eq.s32.totalorder %s21, 0
      %p105 = por %p103, %p104
      %p106 = scmp.ne.s32.totalorder %s94, %s95
      %p107 = scmp.eq.s32.totalorder %s22, 1
      %p108 = por %p106, %p107
      %p110 = scmp.ne.s32.totalorder %s95, %s109
      %p111 = scmp.eq.s32.totalorder %s22, 0
      %p112 = por %p110, %p111
      %s114 = sadd.s32 %s113, 1
      %p117 = scmp.eq.s32.totalorder %s16, 1
      %p118 = scmp.ne.s32.totalorder %s113, %s115
      %p119 = scmp.eq.s32.totalorder %s16, 0
      %p120 = por %p118, %p119
      %p121 = scmp.ne.s32.totalorder %s113, %s115
      %p122 = scmp.eq.s32.totalorder %s21, 1
      %p123 = por %p121, %p122
      %p124 = scmp.ne.s32.totalorder %s115, %s116
      %p125 = scmp.eq.s32.totalorder %s21, 0
      %p126 = por %p124, %p125
      %p127 = scmp.ne.s32.totalorder %s115, %s116
      %p128 = scmp.eq.s32.totalorder %s22, 1
      %p129 = por %p127, %p128
      %p131 = scmp.ne.s32.totalorder %s116, %s130
      %p132 = scmp.eq.s32.totalorder %s22, 0
      %p133 = por %p131, %p132
      %s135 = sadd.s32 %s134, 1
      %p138 = scmp.eq.s32.totalorder %s16, 1
      %p139 = scmp.ne.s32.totalorder %s134, %s136
      %p140 = scmp.eq.s32.totalorder %s16, 0
      %p141 = por %p139, %p140
      %p142 = scmp.ne.s32.totalorder %s134, %s136
      %p143 = scmp.eq.s32.totalorder %s21, 1
      %p144 = por %p142, %p143
      %p145 = scmp.ne.s32.totalorder %s136, %s137
      %p146 = scmp.eq.s32.totalorder %s21, 0
      %p147 = por %p145, %p146
      %p148 = scmp.ne.s32.totalorder %s136, %s137
      %p149 = scmp.eq.s32.totalorder %s22, 1
      %p150 = por %p148, %p149
      %p152 = scmp.ne.s32.totalorder %s137, %s151
      %p153 = scmp.eq.s32.totalorder %s22, 0
      %p154 = por %p152, %p153
      %s156 = sadd.s32 %s155, 1
      %p159 = scmp.eq.s32.totalorder %s16, 1
      %p160 = scmp.ne.s32.totalorder %s155, %s157
      %p161 = scmp.eq.s32.totalorder %s16, 0
      %p162 = por %p160, %p161
      %p163 = scmp.ne.s32.totalorder %s155, %s157
      %p164 = scmp.eq.s32.totalorder %s21, 1
      %p165 = por %p163, %p164
      %p166 = scmp.ne.s32.totalorder %s157, %s158
      %p167 = scmp.eq.s32.totalorder %s21, 0
      %p168 = por %p166, %p167
      %p169 = scmp.ne.s32.totalorder %s157, %s158
      %p170 = scmp.eq.s32.totalorder %s22, 1
      %p171 = por %p169, %p170
      %p173 = scmp.ne.s32.totalorder %s158, %s172
      %p174 = scmp.eq.s32.totalorder %s22, 0
      %p175 = por %p173, %p174
      %s176 = ssub.s32 %s16, %s23
      %p177 = scmp.eq.s32.totalorder %s176, 0
      %s179 = sadd.s32 %s178, 1
      %s180 = scalar_select %p177, %s178, %s179
      %p183 = pneg %p177
      %p184 = scmp.eq.s32.totalorder %s16, 1
      %p185 = por %p183, %p184
      %p186 = scmp.ne.s32.totalorder %s178, %s181
      %p187 = scmp.eq.s32.totalorder %s16, 0
      %p188 = por %p186, %p187
      %p189 = scmp.ne.s32.totalorder %s178, %s181
      %p190 = scmp.eq.s32.totalorder %s21, 1
      %p191 = por %p189, %p190
      %p192 = scmp.ne.s32.totalorder %s181, %s182
      %p193 = scmp.eq.s32.totalorder %s21, 0
      %p194 = por %p192, %p193
      %p195 = scmp.ne.s32.totalorder %s181, %s182
      %p196 = scmp.eq.s32.totalorder %s22, 1
      %p197 = por %p195, %p196
      %p199 = scmp.ne.s32.totalorder %s182, %s198
      %p200 = scmp.eq.s32.totalorder %s22, 0
      %p201 = por %p199, %p200
      %p202 = scmp.le.s32.totalorder 1, %s16
      %p203 = scmp.lt.s32.totalorder %s16, 3
      %p204 = pnand %p202, %p203
      %p205 = pneg %p204
      // Predicated region
      $region9: #{mapping_mlp_forward.1} parent=5 // pred_check
        _
      $region10: #{mapping_mlp_forward.1} parent=5 // pred_check_branch
        %207 = sbr.rel (%p204) target = $region12
      $region11: #{mapping_mlp_forward.1} parent=5 // pred_region
        %s208 = ssub.s32 %s16, 1
        // Predicated region
        $region13: #{mapping_mlp_forward.1} parent=11 // pred_check
          %p209 = pneg %p63
        $region14: #{mapping_mlp_forward.1} parent=11 // pred_check_branch
          %211 = sbr.rel (%p209) target = $region16
        $region15: #{mapping_mlp_forward.1} parent=11 // pred_region
          _
        $region16: #{mapping_mlp_forward.1} parent=11 // pred_fallthru
          _
        // Predicated region
        $region17: #{mapping_mlp_forward.1} parent=11 // pred_check
          %p212 = pneg %p84
        $region18: #{mapping_mlp_forward.1} parent=11 // pred_check_branch
          %214 = sbr.rel (%p212) target = $region20
        $region19: #{mapping_mlp_forward.1} parent=11 // pred_region
          _
        $region20: #{mapping_mlp_forward.1} parent=11 // pred_fallthru
          _
        // Predicated region
        $region21: #{mapping_mlp_forward.1} parent=11 // pred_check
          %p215 = pneg %p105
        $region22: #{mapping_mlp_forward.1} parent=11 // pred_check_branch
          %217 = sbr.rel (%p215) target = $region24
        $region23: #{mapping_mlp_forward.1} parent=11 // pred_region
          _
        $region24: #{mapping_mlp_forward.1} parent=11 // pred_fallthru
          _
        // Predicated region
        $region25: #{mapping_mlp_forward.1} parent=11 // pred_check
          %p218 = pneg %p126
        $region26: #{mapping_mlp_forward.1} parent=11 // pred_check_branch
          %220 = sbr.rel (%p218) target = $region28
        $region27: #{mapping_mlp_forward.1} parent=11 // pred_region
          _
        $region28: #{mapping_mlp_forward.1} parent=11 // pred_fallthru
          _
        // Predicated region
        $region29: #{mapping_mlp_forward.1} parent=11 // pred_check
          %p221 = pneg %p147
        $region30: #{mapping_mlp_forward.1} parent=11 // pred_check_branch
          %223 = sbr.rel (%p221) target = $region32
        $region31: #{mapping_mlp_forward.1} parent=11 // pred_region
          _
        $region32: #{mapping_mlp_forward.1} parent=11 // pred_fallthru
          _
        // Predicated region
        $region33: #{mapping_mlp_forward.1} parent=11 // pred_check
          %p224 = pneg %p168
        $region34: #{mapping_mlp_forward.1} parent=11 // pred_check_branch
          %226 = sbr.rel (%p224) target = $region36
        $region35: #{mapping_mlp_forward.1} parent=11 // pred_region
          _
        $region36: #{mapping_mlp_forward.1} parent=11 // pred_fallthru
          _
      $region12: #{mapping_mlp_forward.1} parent=5 // pred_fallthru
        _
      %p227 = scmp.lt.s32.totalorder %s16, 2
      // Predicated region
      $region37: #{mapping_mlp_forward.1} parent=5 // pred_check
        %p228 = pneg %p227
      $region38: #{mapping_mlp_forward.1} parent=5 // pred_check_branch
        %230 = sbr.rel (%p228) target = $region40
      $region39: #{mapping_mlp_forward.1} parent=5 // pred_region
        // Predicated region
        $region41: #{mapping_mlp_forward.1} parent=39 // pred_check
          %p231 = pneg %p36
        $region42: #{mapping_mlp_forward.1} parent=39 // pred_check_branch
          %233 = sbr.rel (%p231) target = $region44
        $region43: #{mapping_mlp_forward.1} parent=39 // pred_region
          %s234 = smul.u32 4, %s16
          %p235 = scmp.lt.s32.totalorder %s234, 7
          %s236 = scalar_select %p235, %s234, 7
          %s237 = smul.addr %s236, 2
          %s238 = scalar_lea.vmem %s0, %s237
          %s239 = smul.u32 4, %s16
        $region44: #{mapping_mlp_forward.1} parent=39 // pred_fallthru
          _
      $region40: #{mapping_mlp_forward.1} parent=5 // pred_fallthru
        _
      %p240 = scmp.le.s32.totalorder 1, %s16
      %p241 = scmp.lt.s32.totalorder %s16, 3
      %p242 = pnand %p240, %p241
      %p243 = pneg %p242
      // Predicated region
      $region45: #{mapping_mlp_forward.1} parent=5 // pred_check
        _
      $region46: #{mapping_mlp_forward.1} parent=5 // pred_check_branch
        %245 = sbr.rel (%p242) target = $region48
      $region47: #{mapping_mlp_forward.1} parent=5 // pred_region
        %s246 = ssub.s32 %s16, 1
        %s247 = smul.u32 4, %s21
        %p248 = scmp.lt.s32.totalorder %s247, 7
        %s249 = scalar_select %p248, %s247, 7
        %s250 = smul.addr %s249, 2
        %s251 = scalar_lea.vmem %s0, %s250
        %p252 = pneg %p42
        %p253 = pneg %p39
        %p254 = pneg %p63
        %p255 = pneg %p60
        %p256 = pneg %p84
        %p257 = pneg %p81
        %p258 = pneg %p105
        %p259 = pneg %p102
        %p260 = pneg %p126
        %p261 = pneg %p123
        %p262 = pneg %p147
        %p263 = pneg %p144
        %p264 = pneg %p168
        %p265 = pneg %p165
        %p266 = pneg %p194
        %p267 = pneg %p191
        %s268 = sand.u32 %s181, 1
        %s269 = scalar_lea.sflag [#allocation3], %s268
        %s270 = sand.u32 %s181, 1
        %s271 = smul.addr %s270, 8
        %s272 = scalar_lea.vmem [#allocation2], %s271
        %s273 = smul.u32 4, %s21
        %p274 = scmp.lt.s32.totalorder %s273, 7
        %s275 = scalar_select %p274, %s273, 7
        %s276 = smul.addr %s275, 2
        %s277 = scalar_lea.vmem %s0, %s276
        %s278 = smul.u32 4, %s21
        %s279 = smul.u32 4, %s21
        %v280 = vld [vmem:[%s1] sm:$0xff]
        %v281 = vld [vmem:[%s1 + $0x8] sm:$0xff]
        %v282 = vld [vmem:[%s1 + $0x10] sm:$0xff]
        %v283 = vld [vmem:[%s1 + $0x18] sm:$0xff]
        %v284 = vld [vmem:[%s2] sm:$0xff]
        %v285 = vld [vmem:[%s2 + $0x8] sm:$0xff]
        %v286 = vld [vmem:[%s2 + $0x10] sm:$0xff]
        %v287 = vld [vmem:[%s2 + $0x18] sm:$0xff]
        %v288 = vld [vmem:[%s3] sm:$0xff]
        %v289 = vld [vmem:[%s3 + $0x8] sm:$0xff]
        %v290 = vld [vmem:[%s3 + $0x10] sm:$0xff]
        %v291 = vld [vmem:[%s3 + $0x18] sm:$0xff]
        %v292 = vld [vmem:[%s4] sm:$0xff]
        %v293 = vld [vmem:[%s4 + $0x8] sm:$0xff]
        %v294 = vld [vmem:[%s4 + $0x10] sm:$0xff]
        %v295 = vld [vmem:[%s4 + $0x18] sm:$0xff]
        %v296 = vld [vmem:[%s5] sm:$0x3]
        %v297 = vld [vmem:[%s6] sm:$0x3]
        %v298 = vld [vmem:[%s277] sm:$0xff]
        %300 = vset.pattern.permute.xlu0 0
        %301 = vperm.xlu0 %300, %v280
        %v302 = vpop.permute.xlu0 %301
        %305 = vset.pattern.permute.xlu0 0
        %306 = vperm.xlu0 %305, %v281
        %v307 = vpop.permute.xlu0 %306
        %310 = vset.pattern.permute.xlu0 0
        %311 = vperm.xlu0 %310, %v282
        %v312 = vpop.permute.xlu0 %311
        %315 = vset.pattern.permute.xlu0 0
        %316 = vperm.xlu0 %315, %v283
        %v317 = vpop.permute.xlu0 %316
        %v320 = vlaneseq
        %v321 = vshrl.u32 %v320, 7
        %v322 = vsub.s32 0, %v321
        %v323 = vrot.slane %v298, %v322
        %v324 = vlaneseq
        %v325 = vshrl.u32 %v324, 7
        %v326 = vsub.s32 2, %v325
        %v327 = vrot.slane %v298, %v326
        %v328 = vlaneseq
        %v329 = vshrl.u32 %v328, 7
        %v330 = vsub.s32 4, %v329
        %v331 = vrot.slane %v298, %v330
        %v332 = vlaneseq
        %v333 = vshrl.u32 %v332, 7
        %v334 = vsub.s32 6, %v333
        %v335 = vrot.slane %v298, %v334
        %v340 = vlaneseq
        %v341 = vshrl.u32 %v340, 7
        %v342 = vsub.s32 0, %v341
        %v343 = vrot.slane %v323, %v342
        %v344 = vlaneseq
        %v345 = vshrl.u32 %v344, 7
        %v346 = vsub.s32 0, %v345
        %v347 = vrot.slane %v327, %v346
        %v348 = vlaneseq
        %v349 = vshrl.u32 %v348, 7
        %v350 = vsub.s32 0, %v349
        %v351 = vrot.slane %v331, %v350
        %v352 = vlaneseq
        %v353 = vshrl.u32 %v352, 7
        %v354 = vsub.s32 0, %v353
        %v355 = vrot.slane %v335, %v354
        %v356 = vmul.f32 %v302, %v343
        %v357 = vmul.f32 %v302, %v347
        %v358 = vmul.f32 %v302, %v351
        %v359 = vmul.f32 %v302, %v355
        %v360 = vmul.f32 %v307, %v343
        %v361 = vmul.f32 %v307, %v347
        %v362 = vmul.f32 %v307, %v351
        %v363 = vmul.f32 %v307, %v355
        %v364 = vmul.f32 %v312, %v343
        %v365 = vmul.f32 %v312, %v347
        %v366 = vmul.f32 %v312, %v351
        %v367 = vmul.f32 %v312, %v355
        %v368 = vmul.f32 %v317, %v343
        %v369 = vmul.f32 %v317, %v347
        %v370 = vmul.f32 %v317, %v351
        %v371 = vmul.f32 %v317, %v355
        %372 = vset.pattern.permute.xlu0 1
        %373 = vperm.xlu0 %372, %v280
        %v374 = vpop.permute.xlu0 %373
        %376 = vset.pattern.permute.xlu0 1
        %377 = vperm.xlu0 %376, %v281
        %v378 = vpop.permute.xlu0 %377
        %380 = vset.pattern.permute.xlu0 1
        %381 = vperm.xlu0 %380, %v282
        %v382 = vpop.permute.xlu0 %381
        %384 = vset.pattern.permute.xlu0 1
        %385 = vperm.xlu0 %384, %v283
        %v386 = vpop.permute.xlu0 %385
        %v388 = vlaneseq
        %v389 = vshrl.u32 %v388, 7
        %v390 = vsub.s32 1, %v389
        %v391 = vrot.slane %v298, %v390
        %v392 = vlaneseq
        %v393 = vshrl.u32 %v392, 7
        %v394 = vsub.s32 3, %v393
        %v395 = vrot.slane %v298, %v394
        %v396 = vlaneseq
        %v397 = vshrl.u32 %v396, 7
        %v398 = vsub.s32 5, %v397
        %v399 = vrot.slane %v298, %v398
        %v400 = vlaneseq
        %v401 = vshrl.u32 %v400, 7
        %v402 = vsub.s32 7, %v401
        %v403 = vrot.slane %v298, %v402
        %v408 = vlaneseq
        %v409 = vshrl.u32 %v408, 7
        %v410 = vsub.s32 1, %v409
        %v411 = vrot.slane %v391, %v410
        %v412 = vlaneseq
        %v413 = vshrl.u32 %v412, 7
        %v414 = vsub.s32 1, %v413
        %v415 = vrot.slane %v395, %v414
        %v416 = vlaneseq
        %v417 = vshrl.u32 %v416, 7
        %v418 = vsub.s32 1, %v417
        %v419 = vrot.slane %v399, %v418
        %v420 = vlaneseq
        %v421 = vshrl.u32 %v420, 7
        %v422 = vsub.s32 1, %v421
        %v423 = vrot.slane %v403, %v422
        %v424 = vmul.f32 %v374, %v411
        %v425 = vmul.f32 %v374, %v415
        %v426 = vmul.f32 %v374, %v419
        %v427 = vmul.f32 %v374, %v423
        %v428 = vmul.f32 %v378, %v411
        %v429 = vmul.f32 %v378, %v415
        %v430 = vmul.f32 %v378, %v419
        %v431 = vmul.f32 %v378, %v423
        %v432 = vmul.f32 %v382, %v411
        %v433 = vmul.f32 %v382, %v415
        %v434 = vmul.f32 %v382, %v419
        %v435 = vmul.f32 %v382, %v423
        %v436 = vmul.f32 %v386, %v411
        %v437 = vmul.f32 %v386, %v415
        %v438 = vmul.f32 %v386, %v419
        %v439 = vmul.f32 %v386, %v423
        %v440 = vadd.f32 %v356, %v424
        %v441 = vadd.f32 %v357, %v425
        %v442 = vadd.f32 %v358, %v426
        %v443 = vadd.f32 %v359, %v427
        %v444 = vadd.f32 %v360, %v428
        %v445 = vadd.f32 %v361, %v429
        %v446 = vadd.f32 %v362, %v430
        %v447 = vadd.f32 %v363, %v431
        %v448 = vadd.f32 %v364, %v432
        %v449 = vadd.f32 %v365, %v433
        %v450 = vadd.f32 %v366, %v434
        %v451 = vadd.f32 %v367, %v435
        %v452 = vadd.f32 %v368, %v436
        %v453 = vadd.f32 %v369, %v437
        %v454 = vadd.f32 %v370, %v438
        %v455 = vadd.f32 %v371, %v439
        %457 = vset.pattern.permute.xlu0 0
        %458 = vperm.xlu0 %457, %v284
        %v459 = vpop.permute.xlu0 %458
        %462 = vset.pattern.permute.xlu0 0
        %463 = vperm.xlu0 %462, %v285
        %v464 = vpop.permute.xlu0 %463
        %467 = vset.pattern.permute.xlu0 0
        %468 = vperm.xlu0 %467, %v286
        %v469 = vpop.permute.xlu0 %468
        %472 = vset.pattern.permute.xlu0 0
        %473 = vperm.xlu0 %472, %v287
        %v474 = vpop.permute.xlu0 %473
        %v476 = vadd.f32 %v440, %v459
        %v477 = vadd.f32 %v441, %v459
        %v478 = vadd.f32 %v442, %v459
        %v479 = vadd.f32 %v443, %v459
        %v480 = vadd.f32 %v444, %v464
        %v481 = vadd.f32 %v445, %v464
        %v482 = vadd.f32 %v446, %v464
        %v483 = vadd.f32 %v447, %v464
        %v484 = vadd.f32 %v448, %v469
        %v485 = vadd.f32 %v449, %v469
        %v486 = vadd.f32 %v450, %v469
        %v487 = vadd.f32 %v451, %v469
        %v488 = vadd.f32 %v452, %v474
        %v489 = vadd.f32 %v453, %v474
        %v490 = vadd.f32 %v454, %v474
        %v491 = vadd.f32 %v455, %v474
        %v492 = vmul.f32 %v476, 0.01
        %v493 = vmul.f32 %v477, 0.01
        %v494 = vmul.f32 %v478, 0.01
        %v495 = vmul.f32 %v479, 0.01
        %v496 = vmul.f32 %v480, 0.01
        %v497 = vmul.f32 %v481, 0.01
        %v498 = vmul.f32 %v482, 0.01
        %v499 = vmul.f32 %v483, 0.01
        %v500 = vmul.f32 %v484, 0.01
        %v501 = vmul.f32 %v485, 0.01
        %v502 = vmul.f32 %v486, 0.01
        %v503 = vmul.f32 %v487, 0.01
        %v504 = vmul.f32 %v488, 0.01
        %v505 = vmul.f32 %v489, 0.01
        %v506 = vmul.f32 %v490, 0.01
        %v507 = vmul.f32 %v491, 0.01
        %v508 = vmax.f32 %v476, %v492
        %v509 = vmax.f32 %v477, %v493
        %v510 = vmax.f32 %v478, %v494
        %v511 = vmax.f32 %v479, %v495
        %v512 = vmax.f32 %v480, %v496
        %v513 = vmax.f32 %v481, %v497
        %v514 = vmax.f32 %v482, %v498
        %v515 = vmax.f32 %v483, %v499
        %v516 = vmax.f32 %v484, %v500
        %v517 = vmax.f32 %v485, %v501
        %v518 = vmax.f32 %v486, %v502
        %v519 = vmax.f32 %v487, %v503
        %v520 = vmax.f32 %v488, %v504
        %v521 = vmax.f32 %v489, %v505
        %v522 = vmax.f32 %v490, %v506
        %v523 = vmax.f32 %v491, %v507
        %525 = vset.pattern.permute.xlu0 0
        %526 = vperm.xlu0 %525, %v292
        %v527 = vpop.permute.xlu0 %526
        %530 = vset.pattern.permute.xlu0 0
        %531 = vperm.xlu0 %530, %v293
        %v532 = vpop.permute.xlu0 %531
        %535 = vset.pattern.permute.xlu0 0
        %536 = vperm.xlu0 %535, %v294
        %v537 = vpop.permute.xlu0 %536
        %540 = vset.pattern.permute.xlu0 0
        %541 = vperm.xlu0 %540, %v295
        %v542 = vpop.permute.xlu0 %541
        %vm544 = vcmask 261120
        %v546 = vsel %vm544, %v288, 0
        %v549 = vsel %vm544, %v289, 0
        %v552 = vsel %vm544, %v290, 0
        %v555 = vsel %vm544, %v291, 0
        %557 = vmatprep.subr.mxu0 %v509
        %558 = vmatpush1.msra.mxu0 %v508
        %559 = vmatprep.subr.mxu0 %v513
        %560 = vmatpush1.msra.mxu0 %v512
        %561 = vmatprep.subr.mxu0 %v517
        %562 = vmatpush1.msra.mxu0 %v516
        %563 = vmatprep.subr.mxu0 %v521
        %564 = vmatpush1.msra.mxu0 %v520
        %565 = vmatprep.subr.mxu0 0.0
        %566 = vmatpush1.msra.mxu0 0.0
        %567 = vmatprep.subr.mxu0 0.0
        %568 = vmatpush1.msra.mxu0 0.0
        %569 = vmatprep.subr.mxu0 0.0
        %570 = vmatpush1.msra.mxu0 0.0
        %571 = vmatprep.subr.mxu0 0.0
        %572 = vmatpush1.msra.mxu0 0.0
        %573 = vmatprep.subr.mxu0 0.0
        %574 = vmatpush1.msra.mxu0 0.0
        %575 = vmatprep.subr.mxu0 0.0
        %576 = vmatpush1.msra.mxu0 0.0
        %577 = vmatprep.subr.mxu0 0.0
        %578 = vmatpush1.msra.mxu0 0.0
        %579 = vmatprep.subr.mxu0 0.0
        %580 = vmatpush1.msra.mxu0 0.0
        %581 = vmatprep.subr.mxu0 0.0
        %582 = vmatpush1.msra.mxu0 0.0
        %583 = vmatprep.subr.mxu0 0.0
        %584 = vmatpush1.msra.mxu0 0.0
        %585 = vmatprep.subr.mxu0 0.0
        %586 = vmatpush1.msra.mxu0 0.0
        %587 = vmatprep.subr.mxu0 0.0
        %588 = vmatpush1.msra.mxu0 0.0
        %589 = vmatprep.subr.mxu0 0.0
        %590 = vmatpush1.msra.mxu0 0.0
        %591 = vmatprep.subr.mxu0 0.0
        %592 = vmatpush1.msra.mxu0 0.0
        %593 = vmatprep.subr.mxu0 0.0
        %594 = vmatpush1.msra.mxu0 0.0
        %595 = vmatprep.subr.mxu0 0.0
        %596 = vmatpush1.msra.mxu0 0.0
        %597 = vmatprep.subr.mxu0 0.0
        %598 = vmatpush1.msra.mxu0 0.0
        %599 = vmatprep.subr.mxu0 0.0
        %600 = vmatpush1.msra.mxu0 0.0
        %601 = vmatprep.subr.mxu0 0.0
        %602 = vmatpush1.msra.mxu0 0.0
        %603 = vmatprep.subr.mxu0 0.0
        %604 = vmatpush1.msra.mxu0 0.0
        %605 = vmatprep.subr.mxu0 0.0
        %606 = vmatpush1.msra.mxu0 0.0
        %607 = vmatprep.subr.mxu0 0.0
        %608 = vmatpush1.msra.mxu0 0.0
        %609 = vmatprep.subr.mxu0 0.0
        %610 = vmatpush1.msra.mxu0 0.0
        %611 = vmatprep.subr.mxu0 0.0
        %612 = vmatpush1.msra.mxu0 0.0
        %613 = vmatprep.subr.mxu0 0.0
        %614 = vmatpush1.msra.mxu0 0.0
        %615 = vmatprep.subr.mxu0 0.0
        %616 = vmatpush1.msra.mxu0 0.0
        %617 = vmatprep.subr.mxu0 0.0
        %618 = vmatpush1.msra.mxu0 0.0
        %619 = vmatprep.subr.mxu0 0.0
        %620 = vmatpush1.msra.mxu0 0.0
        %621 = vmatprep.mubr.f32.mxu0 0.0
        %622 = vmatmul.mubr.f32.gmra.mrb[0].mxu0 %v546
        %v623 = vpop.f32.mrb[0].mxu0
        %v624 = vadd.f32 %v527, %v623
        %v625 = vpop.f32.mrb[0].mxu0
        %v626 = vadd.f32 %v527, %v625
        %627 = vmatprep.mubr.f32.mxu0 0.0
        %628 = vmatmul.mubr.f32.gmra.mrb[0].mxu0 %v549
        %v629 = vpop.f32.mrb[0].mxu0
        %v630 = vadd.f32 %v532, %v629
        %v631 = vpop.f32.mrb[0].mxu0
        %v632 = vadd.f32 %v532, %v631
        %633 = vmatprep.mubr.f32.mxu0 0.0
        %634 = vmatmul.mubr.f32.gmra.mrb[0].mxu0 %v552
        %v635 = vpop.f32.mrb[0].mxu0
        %v636 = vadd.f32 %v537, %v635
        %v637 = vpop.f32.mrb[0].mxu0
        %v638 = vadd.f32 %v537, %v637
        %639 = vmatprep.mubr.f32.mxu0 0.0
        %640 = vmatmul.mubr.f32.gmra.mrb[0].mxu0 %v555
        %v641 = vpop.f32.mrb[0].mxu0
        %v642 = vadd.f32 %v542, %v641
        %v643 = vpop.f32.mrb[0].mxu0
        %v644 = vadd.f32 %v542, %v643
        %645 = vdwg.mxu0
        %646 = vmatprep.subr.mxu0 %v511
        %647 = vmatpush1.msra.mxu0 %v510
        %648 = vmatprep.subr.mxu0 %v515
        %649 = vmatpush1.msra.mxu0 %v514
        %650 = vmatprep.subr.mxu0 %v519
        %651 = vmatpush1.msra.mxu0 %v518
        %652 = vmatprep.subr.mxu0 %v523
        %653 = vmatpush1.msra.mxu0 %v522
        %654 = vmatprep.subr.mxu0 0.0
        %655 = vmatpush1.msra.mxu0 0.0
        %656 = vmatprep.subr.mxu0 0.0
        %657 = vmatpush1.msra.mxu0 0.0
        %658 = vmatprep.subr.mxu0 0.0
        %659 = vmatpush1.msra.mxu0 0.0
        %660 = vmatprep.subr.mxu0 0.0
        %661 = vmatpush1.msra.mxu0 0.0
        %662 = vmatprep.subr.mxu0 0.0
        %663 = vmatpush1.msra.mxu0 0.0
        %664 = vmatprep.subr.mxu0 0.0
        %665 = vmatpush1.msra.mxu0 0.0
        %666 = vmatprep.subr.mxu0 0.0
        %667 = vmatpush1.msra.mxu0 0.0
        %668 = vmatprep.subr.mxu0 0.0
        %669 = vmatpush1.msra.mxu0 0.0
        %670 = vmatprep.subr.mxu0 0.0
        %671 = vmatpush1.msra.mxu0 0.0
        %672 = vmatprep.subr.mxu0 0.0
        %673 = vmatpush1.msra.mxu0 0.0
        %674 = vmatprep.subr.mxu0 0.0
        %675 = vmatpush1.msra.mxu0 0.0
        %676 = vmatprep.subr.mxu0 0.0
        %677 = vmatpush1.msra.mxu0 0.0
        %678 = vmatprep.subr.mxu0 0.0
        %679 = vmatpush1.msra.mxu0 0.0
        %680 = vmatprep.subr.mxu0 0.0
        %681 = vmatpush1.msra.mxu0 0.0
        %682 = vmatprep.subr.mxu0 0.0
        %683 = vmatpush1.msra.mxu0 0.0
        %684 = vmatprep.subr.mxu0 0.0
        %685 = vmatpush1.msra.mxu0 0.0
        %686 = vmatprep.subr.mxu0 0.0
        %687 = vmatpush1.msra.mxu0 0.0
        %688 = vmatprep.subr.mxu0 0.0
        %689 = vmatpush1.msra.mxu0 0.0
        %690 = vmatprep.subr.mxu0 0.0
        %691 = vmatpush1.msra.mxu0 0.0
        %692 = vmatprep.subr.mxu0 0.0
        %693 = vmatpush1.msra.mxu0 0.0
        %694 = vmatprep.subr.mxu0 0.0
        %695 = vmatpush1.msra.mxu0 0.0
        %696 = vmatprep.subr.mxu0 0.0
        %697 = vmatpush1.msra.mxu0 0.0
        %698 = vmatprep.subr.mxu0 0.0
        %699 = vmatpush1.msra.mxu0 0.0
        %700 = vmatprep.subr.mxu0 0.0
        %701 = vmatpush1.msra.mxu0 0.0
        %702 = vmatprep.subr.mxu0 0.0
        %703 = vmatpush1.msra.mxu0 0.0
        %704 = vmatprep.subr.mxu0 0.0
        %705 = vmatpush1.msra.mxu0 0.0
        %706 = vmatprep.subr.mxu0 0.0
        %707 = vmatpush1.msra.mxu0 0.0
        %708 = vmatprep.subr.mxu0 0.0
        %709 = vmatpush1.msra.mxu0 0.0
        %710 = vmatprep.mubr.f32.mxu0 0.0
        %711 = vmatmul.mubr.f32.gmra.mrb[0].mxu0 %v546
        %v712 = vpop.f32.mrb[0].mxu0
        %v713 = vadd.f32 %v527, %v712
        %v714 = vpop.f32.mrb[0].mxu0
        %v715 = vadd.f32 %v527, %v714
        %716 = vmatprep.mubr.f32.mxu0 0.0
        %717 = vmatmul.mubr.f32.gmra.mrb[0].mxu0 %v549
        %v718 = vpop.f32.mrb[0].mxu0
        %v719 = vadd.f32 %v532, %v718
        %v720 = vpop.f32.mrb[0].mxu0
        %v721 = vadd.f32 %v532, %v720
        %722 = vmatprep.mubr.f32.mxu0 0.0
        %723 = vmatmul.mubr.f32.gmra.mrb[0].mxu0 %v552
        %v724 = vpop.f32.mrb[0].mxu0
        %v725 = vadd.f32 %v537, %v724
        %v726 = vpop.f32.mrb[0].mxu0
        %v727 = vadd.f32 %v537, %v726
        %728 = vmatprep.mubr.f32.mxu0 0.0
        %729 = vmatmul.mubr.f32.gmra.mrb[0].mxu0 %v555
        %v730 = vpop.f32.mrb[0].mxu0
        %v731 = vadd.f32 %v542, %v730
        %v732 = vpop.f32.mrb[0].mxu0
        %v733 = vadd.f32 %v542, %v732
        %734 = vdwg.mxu0
        %v735 = vmul.f32 %v624, 0.01
        %v736 = vmul.f32 %v626, 0.01
        %v737 = vmul.f32 %v713, 0.01
        %v738 = vmul.f32 %v715, 0.01
        %v739 = vmul.f32 %v630, 0.01
        %v740 = vmul.f32 %v632, 0.01
        %v741 = vmul.f32 %v719, 0.01
        %v742 = vmul.f32 %v721, 0.01
        %v743 = vmul.f32 %v636, 0.01
        %v744 = vmul.f32 %v638, 0.01
        %v745 = vmul.f32 %v725, 0.01
        %v746 = vmul.f32 %v727, 0.01
        %v747 = vmul.f32 %v642, 0.01
        %v748 = vmul.f32 %v644, 0.01
        %v749 = vmul.f32 %v731, 0.01
        %v750 = vmul.f32 %v733, 0.01
        %v751 = vmax.f32 %v624, %v735
        %v752 = vmax.f32 %v626, %v736
        %v753 = vmax.f32 %v713, %v737
        %v754 = vmax.f32 %v715, %v738
        %v755 = vmax.f32 %v630, %v739
        %v756 = vmax.f32 %v632, %v740
        %v757 = vmax.f32 %v719, %v741
        %v758 = vmax.f32 %v721, %v742
        %v759 = vmax.f32 %v636, %v743
        %v760 = vmax.f32 %v638, %v744
        %v761 = vmax.f32 %v725, %v745
        %v762 = vmax.f32 %v727, %v746
        %v763 = vmax.f32 %v642, %v747
        %v764 = vmax.f32 %v644, %v748
        %v765 = vmax.f32 %v731, %v749
        %v766 = vmax.f32 %v733, %v750
        %768 = vset.pattern.permute.xlu0 0
        %769 = vperm.xlu0 %768, %v297
        %v770 = vpop.permute.xlu0 %769
        %v773 = vsel %vm544, %v296, 0
        %775 = vmatprep.subr.mxu0 %v752
        %776 = vmatpush1.msra.mxu0 %v751
        %777 = vmatprep.subr.mxu0 %v756
        %778 = vmatpush1.msra.mxu0 %v755
        %779 = vmatprep.subr.mxu0 %v760
        %780 = vmatpush1.msra.mxu0 %v759
        %781 = vmatprep.subr.mxu0 %v764
        %782 = vmatpush1.msra.mxu0 %v763
        %783 = vmatprep.subr.mxu0 0.0
        %784 = vmatpush1.msra.mxu0 0.0
        %785 = vmatprep.subr.mxu0 0.0
        %786 = vmatpush1.msra.mxu0 0.0
        %787 = vmatprep.subr.mxu0 0.0
        %788 = vmatpush1.msra.mxu0 0.0
        %789 = vmatprep.subr.mxu0 0.0
        %790 = vmatpush1.msra.mxu0 0.0
        %791 = vmatprep.subr.mxu0 0.0
        %792 = vmatpush1.msra.mxu0 0.0
        %793 = vmatprep.subr.mxu0 0.0
        %794 = vmatpush1.msra.mxu0 0.0
        %795 = vmatprep.subr.mxu0 0.0
        %796 = vmatpush1.msra.mxu0 0.0
        %797 = vmatprep.subr.mxu0 0.0
        %798 = vmatpush1.msra.mxu0 0.0
        %799 = vmatprep.subr.mxu0 0.0
        %800 = vmatpush1.msra.mxu0 0.0
        %801 = vmatprep.subr.mxu0 0.0
        %802 = vmatpush1.msra.mxu0 0.0
        %803 = vmatprep.subr.mxu0 0.0
        %804 = vmatpush1.msra.mxu0 0.0
        %805 = vmatprep.subr.mxu0 0.0
        %806 = vmatpush1.msra.mxu0 0.0
        %807 = vmatprep.subr.mxu0 0.0
        %808 = vmatpush1.msra.mxu0 0.0
        %809 = vmatprep.subr.mxu0 0.0
        %810 = vmatpush1.msra.mxu0 0.0
        %811 = vmatprep.subr.mxu0 0.0
        %812 = vmatpush1.msra.mxu0 0.0
        %813 = vmatprep.subr.mxu0 0.0
        %814 = vmatpush1.msra.mxu0 0.0
        %815 = vmatprep.subr.mxu0 0.0
        %816 = vmatpush1.msra.mxu0 0.0
        %817 = vmatprep.subr.mxu0 0.0
        %818 = vmatpush1.msra.mxu0 0.0
        %819 = vmatprep.subr.mxu0 0.0
        %820 = vmatpush1.msra.mxu0 0.0
        %821 = vmatprep.subr.mxu0 0.0
        %822 = vmatpush1.msra.mxu0 0.0
        %823 = vmatprep.subr.mxu0 0.0
        %824 = vmatpush1.msra.mxu0 0.0
        %825 = vmatprep.subr.mxu0 0.0
        %826 = vmatpush1.msra.mxu0 0.0
        %827 = vmatprep.subr.mxu0 0.0
        %828 = vmatpush1.msra.mxu0 0.0
        %829 = vmatprep.subr.mxu0 0.0
        %830 = vmatpush1.msra.mxu0 0.0
        %831 = vmatprep.subr.mxu0 0.0
        %832 = vmatpush1.msra.mxu0 0.0
        %833 = vmatprep.subr.mxu0 0.0
        %834 = vmatpush1.msra.mxu0 0.0
        %835 = vmatprep.subr.mxu0 0.0
        %836 = vmatpush1.msra.mxu0 0.0
        %837 = vmatprep.subr.mxu0 0.0
        %838 = vmatpush1.msra.mxu0 0.0
        %839 = vmatprep.mubr.f32.mxu0 0.0
        %840 = vmatmul.mubr.f32.gmra.mrb[0].mxu0 %v773
        %v841 = vpop.f32.mrb[0].mxu0
        %v842 = vadd.f32 %v770, %v841
        %v843 = vpop.f32.mrb[0].mxu0
        %v844 = vadd.f32 %v770, %v843
        %845 = vdwg.mxu0
        %846 = vmatprep.subr.mxu0 %v754
        %847 = vmatpush1.msra.mxu0 %v753
        %848 = vmatprep.subr.mxu0 %v758
        %849 = vmatpush1.msra.mxu0 %v757
        %850 = vmatprep.subr.mxu0 %v762
        %851 = vmatpush1.msra.mxu0 %v761
        %852 = vmatprep.subr.mxu0 %v766
        %853 = vmatpush1.msra.mxu0 %v765
        %854 = vmatprep.subr.mxu0 0.0
        %855 = vmatpush1.msra.mxu0 0.0
        %856 = vmatprep.subr.mxu0 0.0
        %857 = vmatpush1.msra.mxu0 0.0
        %858 = vmatprep.subr.mxu0 0.0
        %859 = vmatpush1.msra.mxu0 0.0
        %860 = vmatprep.subr.mxu0 0.0
        %861 = vmatpush1.msra.mxu0 0.0
        %862 = vmatprep.subr.mxu0 0.0
        %863 = vmatpush1.msra.mxu0 0.0
        %864 = vmatprep.subr.mxu0 0.0
        %865 = vmatpush1.msra.mxu0 0.0
        %866 = vmatprep.subr.mxu0 0.0
        %867 = vmatpush1.msra.mxu0 0.0
        %868 = vmatprep.subr.mxu0 0.0
        %869 = vmatpush1.msra.mxu0 0.0
        %870 = vmatprep.subr.mxu0 0.0
        %871 = vmatpush1.msra.mxu0 0.0
        %872 = vmatprep.subr.mxu0 0.0
        %873 = vmatpush1.msra.mxu0 0.0
        %874 = vmatprep.subr.mxu0 0.0
        %875 = vmatpush1.msra.mxu0 0.0
        %876 = vmatprep.subr.mxu0 0.0
        %877 = vmatpush1.msra.mxu0 0.0
        %878 = vmatprep.subr.mxu0 0.0
        %879 = vmatpush1.msra.mxu0 0.0
        %880 = vmatprep.subr.mxu0 0.0
        %881 = vmatpush1.msra.mxu0 0.0
        %882 = vmatprep.subr.mxu0 0.0
        %883 = vmatpush1.msra.mxu0 0.0
        %884 = vmatprep.subr.mxu0 0.0
        %885 = vmatpush1.msra.mxu0 0.0
        %886 = vmatprep.subr.mxu0 0.0
        %887 = vmatpush1.msra.mxu0 0.0
        %888 = vmatprep.subr.mxu0 0.0
        %889 = vmatpush1.msra.mxu0 0.0
        %890 = vmatprep.subr.mxu0 0.0
        %891 = vmatpush1.msra.mxu0 0.0
        %892 = vmatprep.subr.mxu0 0.0
        %893 = vmatpush1.msra.mxu0 0.0
        %894 = vmatprep.subr.mxu0 0.0
        %895 = vmatpush1.msra.mxu0 0.0
        %896 = vmatprep.subr.mxu0 0.0
        %897 = vmatpush1.msra.mxu0 0.0
        %898 = vmatprep.subr.mxu0 0.0
        %899 = vmatpush1.msra.mxu0 0.0
        %900 = vmatprep.subr.mxu0 0.0
        %901 = vmatpush1.msra.mxu0 0.0
        %902 = vmatprep.subr.mxu0 0.0
        %903 = vmatpush1.msra.mxu0 0.0
        %904 = vmatprep.subr.mxu0 0.0
        %905 = vmatpush1.msra.mxu0 0.0
        %906 = vmatprep.subr.mxu0 0.0
        %907 = vmatpush1.msra.mxu0 0.0
        %908 = vmatprep.subr.mxu0 0.0
        %909 = vmatpush1.msra.mxu0 0.0
        %910 = vmatprep.mubr.f32.mxu0 0.0
        %911 = vmatmul.mubr.f32.gmra.mrb[0].mxu0 %v773
        %v912 = vpop.f32.mrb[0].mxu0
        %v913 = vadd.f32 %v770, %v912
        %v914 = vpop.f32.mrb[0].mxu0
        %v915 = vadd.f32 %v770, %v914
        %916 = vdwg.mxu0
        %v921 = vcombine.low %v842, %v844
        %v922 = vcombine.low %v913, %v915
        %v924 = vunpack.c.l.s4 1983009808
        %v925 = vunpack.c.0.s8 %v924
        %v926 = vlaneseq
        %v927 = vshrl.u32 %v926, 7
        %v928 = vsub.s32 %v925, %v927
        %v929 = vrot.slane %v921, %v928
        %v931 = vunpack.c.l.s4 1983009808
        %v932 = vunpack.c.0.s8 %v931
        %v933 = vlaneseq
        %v934 = vshrl.u32 %v933, 7
        %v935 = vsub.s32 %v932, %v934
        %v936 = vrot.slane %v922, %v935
        %v937 = vcombine.low %v929, %v936
        %939 = vst [vmem:[%s272] sm:$0xff] %v937
        %s940 = sand.u32 %s181, 1
        %s941 = scalar_lea.sflag [#allocation3], %s940
        %s942 = sand.u32 %s181, 1
        %s943 = smul.addr %s942, 8
        %s944 = scalar_lea.vmem [#allocation2], %s943
        // Predicated region
        $region49: #{mapping_mlp_forward.1} parent=47 // pred_check
          %p945 = pneg %p191
        $region50: #{mapping_mlp_forward.1} parent=47 // pred_check_branch
          %947 = sbr.rel (%p945) target = $region52
        $region51: #{mapping_mlp_forward.1} parent=47 // pred_region
          %s948 = smul.u32 4, %s21
          %s950 = ssub.s32 128, 128
          %951 = vsyncadd %s941, %s950
          %s952 = smul.addr %s948, 32
          %s953 = scalar_lea.hbm %s7, %s952
          %s955 = sshll.u32 %s944, 4
          %s956 = int_to_ptr.vmem [resolvable:$true] %s955
          %958 = dma.vmem_to_hbm [thread:$0]  %s956, 128, %s953, %s941
        $region52: #{mapping_mlp_forward.1} parent=47 // pred_fallthru
          _
      $region48: #{mapping_mlp_forward.1} parent=5 // pred_fallthru
        _
      %p959 = scmp.le.s32.totalorder 2, %s16
      // Predicated region
      $region53: #{mapping_mlp_forward.1} parent=5 // pred_check
        %p960 = pneg %p959
      $region54: #{mapping_mlp_forward.1} parent=5 // pred_check_branch
        %962 = sbr.rel (%p960) target = $region56
      $region55: #{mapping_mlp_forward.1} parent=5 // pred_region
        %s963 = ssub.s32 %s16, 2
        // Predicated region
        $region57: #{mapping_mlp_forward.1} parent=55 // pred_check
          %p964 = pneg %p197
        $region58: #{mapping_mlp_forward.1} parent=55 // pred_check_branch
          %966 = sbr.rel (%p964) target = $region60
        $region59: #{mapping_mlp_forward.1} parent=55 // pred_region
          %s967 = sand.u32 %s182, 1
          %s968 = scalar_lea.sflag [#allocation3], %s967
          %s969 = sand.u32 %s182, 1
          %s970 = smul.addr %s969, 8
          %s971 = scalar_lea.vmem [#allocation2], %s970
          %972 = dma.done %s968, 128
        $region60: #{mapping_mlp_forward.1} parent=55 // pred_fallthru
          _
      $region56: #{mapping_mlp_forward.1} parent=5 // pred_fallthru
        _
    $region6: #{mapping_mlp_forward.1} parent=1 // loop_footer
      %s20 = sadd.s32 1, %s16
    $region7: #{mapping_mlp_forward.1} parent=1 // loop_footer_branch
      %15 = sbr.rel target = $region3
    $region8: #{mapping_mlp_forward.1} parent=1 // loop_exit
      _
    %973 = vsyncpa [#allocation3], 1
    %s974 = scalar_lea.sflag [#allocation3], 1
    %975 = vsyncpa %s974, 1

</llo_original>
